<compile_context>
chip_gen: v5e
topology: v5e:2x2
jax: 0.10.0
libtpu: 0.0.40
codegen_flags: <defaults>
</compile_context>

<pallas_src>
import functools

import jax
import jax.numpy as jnp
from jax.experimental import pallas as pl
from jax.experimental.pallas import tpu as pltpu


def _round_up(x, m):
    return ((x + m - 1) // m) * m


def _sublane(itemsize):
    return 8 if itemsize >= 4 else (16 if itemsize == 2 else 32)


def _vmem_capacity_bytes():
    try:
        return int(pltpu.get_tpu_info().vmem_capacity_bytes)
    except Exception:
        return 64 * 1024 * 1024        # conservative fallback (v7x per-TC VMEM)


def _pick_tiles(N, V, itemsize):
    """Choose (row_tile, v_tile) from chip VMEM capacity and input dtype.

    Working-set model per grid step: 2x input block (double-buffered, input
    dtype) + ~2 f32-sized temporaries.
    """
    cap = _vmem_capacity_bytes()
    budget = cap // 6                  # ~21 MiB on v5e/v6e (128 MiB), ~10 MiB on v7x
    sub = _sublane(itemsize)

    def block_bytes(rows, cols):
        return rows * cols * (2 * itemsize + 2 * 4)

    # Preferred: whole vocab per block, as many rows as fit.
    max_rows = budget // max(1, block_bytes(1, V))
    row_tile = min((max_rows // sub) * sub, 1024)
    if row_tile >= sub:
        row_tile = min(row_tile, _round_up(N, sub))
        return int(row_tile), int(V)

    # Vocab too large even for `sub` rows: split V (online-LSE path).
    max_cols = budget // max(1, block_bytes(sub, 1))
    v_tile = max(128, (max_cols // 128) * 128)
    v_tile = min(v_tile, _round_up(V, 128))
    return int(sub), int(v_tile)


def _seq_ce_kernel(pred_ref, label_ref, loss_ref, m_sc, s_sc, t_sc, *,
                   ignore_index, v_tile, vocab):
    """Online-LSE cross entropy over vocab blocks; per-row loss at last block."""
    j = pl.program_id(1)

    @pl.when(j == 0)
    def _():
        m_sc[...] = jnp.full_like(m_sc, -jnp.inf)
        s_sc[...] = jnp.zeros_like(s_sc)
        t_sc[...] = jnp.zeros_like(t_sc)

    x = pred_ref[...]                                     # (rt, vt), input dtype
    if x.dtype.name not in ("float32", "bfloat16"):
        x = x.astype(jnp.float32)
    labels = label_ref[...]                               # (rt, 1) int32

    # Column indices of this vocab block as a (1, vt) row (no full-tile iota).
    col = jax.lax.broadcasted_iota(jnp.int32, (1, v_tile), 1) + j * v_tile
    if vocab % v_tile != 0:
        # Ragged last vocab block: neutralise out-of-range columns.
        x = jnp.where(col < vocab, x, jnp.array(-jnp.inf, dtype=x.dtype))

    m_prev = m_sc[...]                                                  # (rt, 1) f32
    m_loc = jnp.max(x, axis=-1, keepdims=True).astype(jnp.float32)
    m_new = jnp.maximum(m_prev, m_loc)

    # exp of the shifted block in the input dtype (bf16 EUP on v6e/v7x);
    # the row reductions accumulate in f32.
    p = jnp.exp(x - m_new.astype(x.dtype))
    s_sc[...] = (s_sc[...] * jnp.exp(m_prev - m_new)
                 + jnp.sum(p, axis=-1, keepdims=True, dtype=jnp.float32))

    # Target logit via one-hot select + sum (exact: single nonzero per row).
    t_sc[...] += jnp.sum(jnp.where(col == labels, x, jnp.zeros((), x.dtype)),
                         axis=-1, keepdims=True, dtype=jnp.float32)
    m_sc[...] = m_new

    @pl.when(j == pl.num_programs(1) - 1)
    def _():
        valid = labels != ignore_index   # pad mask already folded into labels
        loss = jnp.log(s_sc[...]) + m_sc[...] - t_sc[...]
        loss_ref[...] = jnp.where(valid, loss, 0.0)


def sequence_cross_entropy(pred, label, lengths=None, masks=None,
                           normalize_length=False, ignore_index=-100,
                           row_tile=None, v_tile=None, vmem_limit_bytes=None):
    """JAX/Pallas equivalent of SequenceCrossEntropy.forward."""
    B, T, V = pred.shape
    if masks is None:
        assert lengths is not None
        # make_pad_mask: True where t >= lengths[b]  (i.e. padding)
        masks = jnp.arange(T, dtype=jnp.int32)[None, :] >= lengths[:, None]

    N = B * T
    itemsize = jnp.dtype(pred.dtype).itemsize
    sub = _sublane(itemsize)
    auto_rt, auto_vt = _pick_tiles(N, V, itemsize)

    rt = auto_rt if row_tile is None else max(sub, (int(row_tile) // sub) * sub)
    if v_tile is None:
        vt = auto_vt
    else:
        vt = int(v_tile)
        vt = V if vt >= V else max(128, (vt // 128) * 128)

    grid_n = pl.cdiv(N, rt)
    grid_v = pl.cdiv(V, vt)

    if vmem_limit_bytes is None:
        vmem_limit_bytes = int(_vmem_capacity_bytes() * 3 // 4)

    pred2 = pred.reshape(N, V)                         # free reshape, never copied
    # Fold the pad mask into the labels (pad behaves exactly like ignore_index).
    # This is the only wrapper-side data movement: N int32's.
    label_eff = jnp.where(masks.reshape(N), ignore_index,
                          label.reshape(N)).astype(jnp.int32).reshape(N, 1)

    kernel = functools.partial(_seq_ce_kernel, ignore_index=ignore_index,
                               v_tile=vt, vocab=V)

    per_row = pl.pallas_call(
        kernel,
        out_shape=jax.ShapeDtypeStruct((N, 1), jnp.float32),
        grid_spec=pltpu.PrefetchScalarGridSpec(
            num_scalar_prefetch=0,
            grid=(grid_n, grid_v),
            in_specs=[
                pl.BlockSpec((rt, vt), lambda i, j: (i, j)),
                pl.BlockSpec((rt, 1), lambda i, j: (i, 0)),
            ],
            out_specs=pl.BlockSpec((rt, 1), lambda i, j: (i, 0)),
            scratch_shapes=[pltpu.VMEM((rt, 1), jnp.float32)] * 3,
        ),
        compiler_params=pltpu.CompilerParams(
            dimension_semantics=("parallel", "arbitrary"),
            vmem_limit_bytes=vmem_limit_bytes),
    )(pred2, label_eff)

    loss_sum = jnp.sum(per_row)
    if normalize_length:
        # NOTE: matches torch — an all-padded batch divides by zero.
        denom = jnp.sum(jnp.logical_not(masks)).astype(jnp.float32)
    else:
        denom = jnp.float32(B)                         # pred.shape[0] in torch
    return loss_sum / denom


def _reference(pred, label, masks, normalize_length, ignore_index):
    """Pure-JAX reference for sanity checks."""
    B, T, V = pred.shape
    logits = pred.reshape(-1, V).astype(jnp.float32)
    lab = label.reshape(-1)
    lse = jax.scipy.special.logsumexp(logits, axis=-1)
    tgt = jnp.take_along_axis(logits, jnp.clip(lab, 0, V - 1)[:, None], axis=-1)[:, 0]
    loss = lse - tgt
    loss = jnp.where(lab == ignore_index, 0.0, loss)
    m = masks.reshape(-1)
    loss = jnp.where(m, 0.0, loss)
    denom = jnp.sum(~m) if normalize_length else B
    return jnp.sum(loss) / denom


if __name__ == "__main__":
    key = jax.random.PRNGKey(0)

    # --- case 1: small shapes straight from the module spec -------------------
    B, T, V = 2, 8, 32
    k1, k2, k3, k4 = jax.random.split(key, 4)
    pred = jax.random.normal(k1, (B, T, V), dtype=jnp.float32)
    label = jax.random.randint(k2, (B, T), 0, V, dtype=jnp.int32)
    label = label.at[0, 3].set(-100)                 # explicit ignore_index hit
    lengths = jnp.array([8, 5], dtype=jnp.int32)     # second sequence padded
    masks = jnp.arange(T, dtype=jnp.int32)[None, :] >= lengths[:, None]

    for norm in (False, True):
        out = jax.block_until_ready(
            sequence_cross_entropy(pred, label, lengths=lengths,
                                   normalize_length=norm))
        ref = _reference(pred, label, masks, norm, -100)
        assert jnp.allclose(out, ref, rtol=1e-5, atol=1e-5), (norm, out, ref)

    # --- case 2: ragged row tail + vocab split (online-LSE, V % v_tile != 0) --
    B2, T2, V2 = 2, 7, 384
    p2 = jax.random.normal(k3, (B2, T2, V2), dtype=jnp.float32)
    l2 = jax.random.randint(k4, (B2, T2), 0, V2, dtype=jnp.int32)
    len2 = jnp.array([7, 4], dtype=jnp.int32)
    m2 = jnp.arange(T2, dtype=jnp.int32)[None, :] >= len2[:, None]
    out2 = jax.block_until_ready(
        sequence_cross_entropy(p2, l2, lengths=len2, normalize_length=True,
                               row_tile=8, v_tile=256))
    ref2 = _reference(p2, l2, m2, True, -100)
    assert jnp.allclose(out2, ref2, rtol=1e-5, atol=1e-5), (out2, ref2)

    # --- case 3: bf16 logits (element-wise chain stays in bf16) ---------------
    p3 = pred.astype(jnp.bfloat16)
    out3 = jax.block_until_ready(
        sequence_cross_entropy(p3, label, lengths=lengths,
                               normalize_length=False))
    ref3 = _reference(p3.astype(jnp.float32), label, masks, False, -100)
    assert jnp.allclose(out3, ref3, rtol=5e-2, atol=5e-2), (out3, ref3)

    print("KERNEL_OK")
</pallas_src>

<mosaic_0001>
module attributes {stable_mosaic.version = 11 : i64} {
  func.func @_seq_ce_kernel(%arg0: i32, %arg1: i32, %arg2: memref<16x32xf32, #tpu.memory_space<vmem>>, %arg3: memref<16x1xi32, #tpu.memory_space<vmem>>, %arg4: memref<16x1xf32, #tpu.memory_space<vmem>>, %arg5: memref<16x1xf32, #tpu.memory_space<vmem>>, %arg6: memref<16x1xf32, #tpu.memory_space<vmem>>, %arg7: memref<16x1xf32, #tpu.memory_space<vmem>>) attributes {dimension_semantics = [#tpu.dimension_semantics<parallel>, #tpu.dimension_semantics<arbitrary>], iteration_bounds = array<i64: 1, 1>, scalar_prefetch = 0 : i64, scratch_operands = 3 : i64, tpu.core_type = #tpu.core_type<tc>, window_params = [{transform_indices = @transform_0, window_bounds = array<i64: 16, 32>}, {transform_indices = @transform_1, window_bounds = array<i64: 16, 1>}, {transform_indices = @transform_2, window_bounds = array<i64: 16, 1>}]} {
    %c0_i32 = arith.constant 0 : i32
    %0 = arith.cmpi eq, %arg1, %c0_i32 : i32
    %1 = arith.extui %0 : i1 to i32
    %c0_i32_0 = arith.constant 0 : i32
    %2 = arith.cmpi ne, %1, %c0_i32_0 : i32
    scf.if %2 {
      %cst_21 = arith.constant 0xFF800000 : f32
      %38 = vector.broadcast %cst_21 : f32 to vector<16x1xf32>
      %c0_22 = arith.constant 0 : index
      %c0_23 = arith.constant 0 : index
      %39 = vector.load %arg5[%c0_22, %c0_23] : memref<16x1xf32, #tpu.memory_space<vmem>>, vector<16x1xf32>
      tpu.vector_store %arg5[%c0_22, %c0_23], %38 {strides = array<i32>} : memref<16x1xf32, #tpu.memory_space<vmem>>, vector<16x1xf32>,
      %cst_24 = arith.constant 0.000000e+00 : f32
      %40 = vector.broadcast %cst_24 : f32 to vector<16x1xf32>
      %c0_25 = arith.constant 0 : index
      %c0_26 = arith.constant 0 : index
      %41 = vector.load %arg6[%c0_25, %c0_26] : memref<16x1xf32, #tpu.memory_space<vmem>>, vector<16x1xf32>
      tpu.vector_store %arg6[%c0_25, %c0_26], %40 {strides = array<i32>} : memref<16x1xf32, #tpu.memory_space<vmem>>, vector<16x1xf32>,
      %cst_27 = arith.constant 0.000000e+00 : f32
      %42 = vector.broadcast %cst_27 : f32 to vector<16x1xf32>
      %c0_28 = arith.constant 0 : index
      %c0_29 = arith.constant 0 : index
      %43 = vector.load %arg7[%c0_28, %c0_29] : memref<16x1xf32, #tpu.memory_space<vmem>>, vector<16x1xf32>
      tpu.vector_store %arg7[%c0_28, %c0_29], %42 {strides = array<i32>} : memref<16x1xf32, #tpu.memory_space<vmem>>, vector<16x1xf32>,
    } else {
    }
    %c0 = arith.constant 0 : index
    %c0_1 = arith.constant 0 : index
    %3 = vector.load %arg2[%c0, %c0_1] : memref<16x32xf32, #tpu.memory_space<vmem>>, vector<16x32xf32>
    %c0_2 = arith.constant 0 : index
    %c0_3 = arith.constant 0 : index
    %4 = vector.load %arg3[%c0_2, %c0_3] : memref<16x1xi32, #tpu.memory_space<vmem>>, vector<16x1xi32>
    %5 = tpu.iota {dimensions = array<i32: 1>} : vector<1x32xi32>
    %c32_i32 = arith.constant 32 : i32
    %6 = arith.muli %arg1, %c32_i32 : i32
    %7 = vector.broadcast %6 : i32 to vector<1x32xi32>
    %8 = arith.addi %5, %7 : vector<1x32xi32>
    %c0_4 = arith.constant 0 : index
    %c0_5 = arith.constant 0 : index
    %9 = vector.load %arg5[%c0_4, %c0_5] : memref<16x1xf32, #tpu.memory_space<vmem>>, vector<16x1xf32>
    %cst = arith.constant dense<0xFF800000> : vector<16xf32>
    %10 = vector.multi_reduction <maximumf>, %3, %cst [1] : vector<16x32xf32> to vector<16xf32>
    %11 = vector.shape_cast %10 : vector<16xf32> to vector<16x1xf32>
    %12 = arith.maximumf %9, %11 : vector<16x1xf32>
    %13 = vector.broadcast %12 : vector<16x1xf32> to vector<16x32xf32>
    %14 = arith.subf %3, %13 : vector<16x32xf32>
    %15 = math.exp %14 : vector<16x32xf32>
    %c0_6 = arith.constant 0 : index
    %c0_7 = arith.constant 0 : index
    %16 = vector.load %arg6[%c0_6, %c0_7] : memref<16x1xf32, #tpu.memory_space<vmem>>, vector<16x1xf32>
    %17 = arith.subf %9, %12 : vector<16x1xf32>
    %18 = math.exp %17 : vector<16x1xf32>
    %19 = arith.mulf %16, %18 : vector<16x1xf32>
    %cst_8 = arith.constant dense<0.000000e+00> : vector<16xf32>
    %20 = vector.multi_reduction <add>, %15, %cst_8 [1] : vector<16x32xf32> to vector<16xf32>
    %21 = vector.shape_cast %20 : vector<16xf32> to vector<16x1xf32>
    %22 = arith.addf %19, %21 : vector<16x1xf32>
    %c0_9 = arith.constant 0 : index
    %c0_10 = arith.constant 0 : index
    %23 = vector.load %arg6[%c0_9, %c0_10] : memref<16x1xf32, #tpu.memory_space<vmem>>, vector<16x1xf32>
    tpu.vector_store %arg6[%c0_9, %c0_10], %22 {strides = array<i32>} : memref<16x1xf32, #tpu.memory_space<vmem>>, vector<16x1xf32>,
    %c0_11 = arith.constant 0 : index
    %c0_12 = arith.constant 0 : index
    %24 = vector.load %arg7[%c0_11, %c0_12] : memref<16x1xf32, #tpu.memory_space<vmem>>, vector<16x1xf32>
    %25 = vector.broadcast %8 : vector<1x32xi32> to vector<16x32xi32>
    %26 = vector.broadcast %4 : vector<16x1xi32> to vector<16x32xi32>
    %27 = arith.cmpi eq, %25, %26 : vector<16x32xi32>
    %cst_13 = arith.constant 0.000000e+00 : f32
    %28 = vector.broadcast %cst_13 : f32 to vector<16x32xf32>
    %29 = arith.select %27, %3, %28 : vector<16x32xi1>, vector<16x32xf32>
    %cst_14 = arith.constant dense<0.000000e+00> : vector<16xf32>
    %30 = vector.multi_reduction <add>, %29, %cst_14 [1] : vector<16x32xf32> to vector<16xf32>
    %31 = vector.shape_cast %30 : vector<16xf32> to vector<16x1xf32>
    %32 = arith.addf %24, %31 : vector<16x1xf32>
    %c0_15 = arith.constant 0 : index
    %c0_16 = arith.constant 0 : index
    %33 = vector.load %arg7[%c0_15, %c0_16] : memref<16x1xf32, #tpu.memory_space<vmem>>, vector<16x1xf32>
    tpu.vector_store %arg7[%c0_15, %c0_16], %32 {strides = array<i32>} : memref<16x1xf32, #tpu.memory_space<vmem>>, vector<16x1xf32>,
    %c0_17 = arith.constant 0 : index
    %c0_18 = arith.constant 0 : index
    %34 = vector.load %arg5[%c0_17, %c0_18] : memref<16x1xf32, #tpu.memory_space<vmem>>, vector<16x1xf32>
    tpu.vector_store %arg5[%c0_17, %c0_18], %12 {strides = array<i32>} : memref<16x1xf32, #tpu.memory_space<vmem>>, vector<16x1xf32>,
    %c0_i32_19 = arith.constant 0 : i32
    %35 = arith.cmpi eq, %arg1, %c0_i32_19 : i32
    %36 = arith.extui %35 : i1 to i32
    %c0_i32_20 = arith.constant 0 : i32
    %37 = arith.cmpi ne, %36, %c0_i32_20 : i32
    scf.if %37 {
      %c-100_i32 = arith.constant -100 : i32
      %38 = vector.broadcast %c-100_i32 : i32 to vector<16x1xi32>
      %39 = arith.cmpi ne, %4, %38 : vector<16x1xi32>
      %c0_21 = arith.constant 0 : index
      %c0_22 = arith.constant 0 : index
      %40 = vector.load %arg6[%c0_21, %c0_22] : memref<16x1xf32, #tpu.memory_space<vmem>>, vector<16x1xf32>
      %41 = math.log %40 : vector<16x1xf32>
      %c0_23 = arith.constant 0 : index
      %c0_24 = arith.constant 0 : index
      %42 = vector.load %arg5[%c0_23, %c0_24] : memref<16x1xf32, #tpu.memory_space<vmem>>, vector<16x1xf32>
      %43 = arith.addf %41, %42 : vector<16x1xf32>
      %c0_25 = arith.constant 0 : index
      %c0_26 = arith.constant 0 : index
      %44 = vector.load %arg7[%c0_25, %c0_26] : memref<16x1xf32, #tpu.memory_space<vmem>>, vector<16x1xf32>
      %45 = arith.subf %43, %44 : vector<16x1xf32>
      %cst_27 = arith.constant 0.000000e+00 : f32
      %46 = vector.broadcast %cst_27 : f32 to vector<16x1xf32>
      %47 = arith.select %39, %45, %46 : vector<16x1xi1>, vector<16x1xf32>
      %c0_28 = arith.constant 0 : index
      %c0_29 = arith.constant 0 : index
      %48 = vector.load %arg4[%c0_28, %c0_29] : memref<16x1xf32, #tpu.memory_space<vmem>>, vector<16x1xf32>
      tpu.vector_store %arg4[%c0_28, %c0_29], %47 {strides = array<i32>} : memref<16x1xf32, #tpu.memory_space<vmem>>, vector<16x1xf32>,
    } else {
    }
    return
  }
  func.func @transform_0(%arg0: i32, %arg1: i32) -> (i32, i32) {
    %c0_i32 = arith.constant 0 : i32
    return %arg0, %arg1 : i32, i32
  }
  func.func @transform_1(%arg0: i32, %arg1: i32) -> (i32, i32) {
    %c0_i32 = arith.constant 0 : i32
    %c0_i32_0 = arith.constant 0 : i32
    return %arg0, %c0_i32 : i32, i32
  }
  func.func @transform_2(%arg0: i32, %arg1: i32) -> (i32, i32) {
    %c0_i32 = arith.constant 0 : i32
    %c0_i32_0 = arith.constant 0 : i32
    return %arg0, %c0_i32 : i32, i32
  }
}

</mosaic_0001>

<llo_original>
// kernel: tpu_custom_call.1
$region0: #{tpu_custom_call.1}
  #allocation0 [shape = 'u32[]', space=smem, size = 0x4, offset = 0x4, fixed_abs, tag = 'smem constant byte address 0x4 - core index']
  #allocation1 [shape = 'u32[72,128]{1,0:T(1,128)}', space=vmem, size = 0x9000, scoped, tag = 'internal scratch']
  #allocation2 [shape = 'f32[16,1]{1,0:T(8,128)}', space=vmem, size = 0x2000, scoped, tag = 'scratch operand']
  #allocation3 [shape = 'f32[16,1]{1,0:T(8,128)}', space=vmem, size = 0x2000, scoped, tag = 'scratch operand']
  #allocation4 [shape = 'f32[16,1]{1,0:T(8,128)}', space=vmem, size = 0x2000, scoped, tag = 'scratch operand']
  %s0 = inlined_call_operand.vmem [shape: f32[16,32], index: 0, kind: input, shape index: {}]
  %s1 = inlined_call_operand.vmem [shape: s32[16,1], index: 1, kind: input, shape index: {}]
  %s2 = inlined_call_operand.vmem [shape: f32[16,1], index: 2, kind: output, shape index: {}]
  %s3 = sld [smem:[#allocation0]]
  $region26: #{tpu_custom_call.1} parent=0
    _
  %s5 = ssub.s32 1, %s3
  %s6 = scalar_select 0, %s5, %s3
  // Predicated region
  $region2: #{tpu_custom_call.1} parent=0 // pred_check
    _
  $region3: #{tpu_custom_call.1} parent=0 // pred_check_branch
    %8 = sbr.rel (0) target = $region5
  $region4: #{tpu_custom_call.1} parent=0 // pred_region
    _
  $region5: #{tpu_custom_call.1} parent=0 // pred_fallthru
    _
  // Predicated region
  $region6: #{tpu_custom_call.1} parent=0 // pred_check
    _
  $region7: #{tpu_custom_call.1} parent=0 // pred_check_branch
    %10 = sbr.rel (0) target = $region9
  $region8: #{tpu_custom_call.1} parent=0 // pred_region
    _
  $region9: #{tpu_custom_call.1} parent=0 // pred_fallthru
    _
  %p11 = scmp.eq.s32.totalorder 0, 0
  // Predicated region
  $region10: #{tpu_custom_call.1} parent=0 // pred_check
    %p12 = pneg %p11
  $region11: #{tpu_custom_call.1} parent=0 // pred_check_branch
    %14 = sbr.rel (%p12) target = $region13
  $region12: #{tpu_custom_call.1} parent=0 // pred_region
    %vm15 = vcmask 7168
    %16 = vst.msk [vmem:[#allocation2] sm:$0xff] %vm15, -inf
    %17 = vst.msk [vmem:[#allocation2 + $0x8] sm:$0xff] %vm15, -inf
    %18 = vst.msk [vmem:[#allocation3] sm:$0xff] %vm15, 0.0
    %19 = vst.msk [vmem:[#allocation3 + $0x8] sm:$0xff] %vm15, 0.0
    %20 = vst.msk [vmem:[#allocation4] sm:$0xff] %vm15, 0.0
    %21 = vst.msk [vmem:[#allocation4 + $0x8] sm:$0xff] %vm15, 0.0
  $region13: #{tpu_custom_call.1} parent=0 // pred_fallthru
    _
  %v22 = vld [vmem:[%s0] sm:$0xff]
  %v23 = vld [vmem:[%s0 + $0x8] sm:$0xff]
  %v24 = vld [vmem:[%s1] sm:$0xff]
  %v25 = vld [vmem:[%s1 + $0x8] sm:$0xff]
  %v26 = vlaneseq
  %v27 = vand.u32 %v26, 127
  %s28 = smul.u32 0, 32
  %v29 = vstv %s28
  %v30 = vadd.s32 %v27, %v29
  %v31 = vld [vmem:[#allocation2] sm:$0xff]
  %v32 = vld [vmem:[#allocation2 + $0x8] sm:$0xff]
  %vm33 = vcmask 261120
  %v34 = vsel %vm33, %v22, -inf
  %35 = vmax.xlane.f32.xlu0 %v34
  %v36 = vpop.xlane.xlu0 %35
  %v37 = vsel %vm33, %v23, -inf
  %38 = vmax.xlane.f32.xlu0 %v37
  %v39 = vpop.xlane.xlu0 %38
  %v40 = vmax.f32 %v31, %v36
  %v41 = vmax.f32 %v32, %v39
  %43 = vset.pattern.permute.xlu0 0
  %44 = vperm.xlu0 %43, %v40
  %v45 = vpop.permute.xlu0 %44
  %48 = vset.pattern.permute.xlu0 0
  %49 = vperm.xlu0 %48, %v41
  %v50 = vpop.permute.xlu0 %49
  %v52 = vsub.f32 %v22, %v45
  %v53 = vsub.f32 %v23, %v50
  %v54 = vmul.f32 %v52, 1.442695
  %v55 = vpow.pop %v54
  %v56 = vmul.f32 %v53, 1.442695
  %v57 = vpow.pop %v56
  %v58 = vld [vmem:[#allocation3] sm:$0xff]
  %v59 = vld [vmem:[#allocation3 + $0x8] sm:$0xff]
  %v60 = vsub.f32 %v31, %v40
  %v61 = vsub.f32 %v32, %v41
  %v62 = vmul.f32 %v60, 1.442695
  %v63 = vpow.pop %v62
  %v64 = vmul.f32 %v61, 1.442695
  %v65 = vpow.pop %v64
  %v66 = vmul.f32 %v58, %v63
  %v67 = vmul.f32 %v59, %v65
  %v68 = vsel %vm33, %v55, 0.0
  %69 = vadd.xlane.f32.xlu0 %v68
  %v70 = vpop.xlane.xlu0 %69
  %v71 = vsel %vm33, %v57, 0.0
  %72 = vadd.xlane.f32.xlu0 %v71
  %v73 = vpop.xlane.xlu0 %72
  %v74 = vadd.f32 %v66, %v70
  %v75 = vadd.f32 %v67, %v73
  %vm76 = vcmask 7168
  %77 = vst.msk [vmem:[#allocation3] sm:$0xff] %vm76, %v74
  %78 = vst.msk [vmem:[#allocation3 + $0x8] sm:$0xff] %vm76, %v75
  %v79 = vld [vmem:[#allocation4] sm:$0xff]
  %v80 = vld [vmem:[#allocation4 + $0x8] sm:$0xff]
  %81 = vset.pattern.permute.xlu0 0
  %82 = vperm.xlu0 %81, %v24
  %v83 = vpop.permute.xlu0 %82
  %84 = vset.pattern.permute.xlu0 0
  %85 = vperm.xlu0 %84, %v25
  %v86 = vpop.permute.xlu0 %85
  %vm87 = vcmp.eq.s32.totalorder %v30, %v83
  %vm88 = vcmp.eq.s32.totalorder %v30, %v86
  %v89 = vsel %vm87, %v22, 0.0
  %v90 = vsel %vm88, %v23, 0.0
  %v91 = vsel %vm33, %v89, 0.0
  %92 = vadd.xlane.f32.xlu0 %v91
  %v93 = vpop.xlane.xlu0 %92
  %v94 = vsel %vm33, %v90, 0.0
  %95 = vadd.xlane.f32.xlu0 %v94
  %v96 = vpop.xlane.xlu0 %95
  %v97 = vadd.f32 %v79, %v93
  %v98 = vadd.f32 %v80, %v96
  %99 = vst.msk [vmem:[#allocation4] sm:$0xff] %vm76, %v97
  %100 = vst.msk [vmem:[#allocation4 + $0x8] sm:$0xff] %vm76, %v98
  %101 = vst.msk [vmem:[#allocation2] sm:$0xff] %vm76, %v40
  %102 = vst.msk [vmem:[#allocation2 + $0x8] sm:$0xff] %vm76, %v41
  // Predicated region
  $region14: #{tpu_custom_call.1} parent=0 // pred_check
    %p103 = pneg %p11
  $region15: #{tpu_custom_call.1} parent=0 // pred_check_branch
    %105 = sbr.rel (%p103) target = $region17
  $region16: #{tpu_custom_call.1} parent=0 // pred_region
    %vm106 = vcmp.ne.s32.totalorder %v24, 4294967196
    %vm107 = vcmp.ne.s32.totalorder %v25, 4294967196
    %v108 = vld [vmem:[#allocation3] sm:$0xff]
    %v109 = vld [vmem:[#allocation3 + $0x8] sm:$0xff]
    %v110 = vlog2.pop %v108
    %v111 = vmul.f32 %v110, 0.6931472
    %v112 = vlog2.pop %v109
    %v113 = vmul.f32 %v112, 0.6931472
    %v114 = vld [vmem:[#allocation2] sm:$0xff]
    %v115 = vld [vmem:[#allocation2 + $0x8] sm:$0xff]
    %v116 = vadd.f32 %v111, %v114
    %v117 = vadd.f32 %v113, %v115
    %v118 = vld [vmem:[#allocation4] sm:$0xff]
    %v119 = vld [vmem:[#allocation4 + $0x8] sm:$0xff]
    %v120 = vsub.f32 %v116, %v118
    %v121 = vsub.f32 %v117, %v119
    %v122 = vsel %vm106, %v120, 0.0
    %v123 = vsel %vm107, %v121, 0.0
    %124 = vst.msk [vmem:[%s2] sm:$0xff] %vm76, %v122
    %125 = vst.msk [vmem:[%s2 + $0x8] sm:$0xff] %vm76, %v123
  $region17: #{tpu_custom_call.1} parent=0 // pred_fallthru
    _
  // Predicated region
  $region18: #{tpu_custom_call.1} parent=0 // pred_check
    _
  $region19: #{tpu_custom_call.1} parent=0 // pred_check_branch
    %127 = sbr.rel (0) target = $region21
  $region20: #{tpu_custom_call.1} parent=0 // pred_region
    _
  $region21: #{tpu_custom_call.1} parent=0 // pred_fallthru
    _
  // Predicated region
  $region22: #{tpu_custom_call.1} parent=0 // pred_check
    _
  $region23: #{tpu_custom_call.1} parent=0 // pred_check_branch
    %129 = sbr.rel (0) target = $region25
  $region24: #{tpu_custom_call.1} parent=0 // pred_region
    _
  $region25: #{tpu_custom_call.1} parent=0 // pred_fallthru
    _

</llo_original>
